<compile_context>
chip_gen: v6e
topology: v6e:2x2x1
jax: 0.10.0
libtpu: 0.0.40
codegen_flags: <defaults>
</compile_context>

<pallas_src>
import functools

import jax
import jax.numpy as jnp
from jax.experimental import pallas as pl
from jax.experimental.pallas import tpu as pltpu


def _round_up(x, m):
    return (x + m - 1) // m * m


def _cnn_kernel(meta, ids_ref, params_ref, out_ref):
    (B, L, D, L_pad, T_pad, NE_pad, f_max, filters, filter_nums, CI_PAD) = meta
    K = f_max * D

    # Static row offsets into the packed parameter slab.
    r_tab = 0
    r_wc = r_tab + NE_pad          # fused conv weight  (K, CI_PAD)
    r_bc = r_wc + K                # conv bias          (row r_bc)
    r_fw = r_bc + 8                # FC weight          (CI_PAD, CI_PAD)
    r_fb = r_fw + CI_PAD           # FC bias            (row r_fb)

    # ---- embedding gather fused as a one-hot matmul ------------------------
    ids = ids_ref[...]                                          # (B*L_pad, 1) i32
    n_tok = B * L_pad
    vocab_iota = jax.lax.broadcasted_iota(jnp.int32, (n_tok, NE_pad), 1)
    one_hot = (ids == vocab_iota).astype(jnp.float32)           # (B*L_pad, NE_pad)
    table = params_ref[r_tab:r_tab + NE_pad, 0:D]               # (NE_pad, D)
    emb = jnp.dot(one_hot, table, preferred_element_type=jnp.float32)
    emb = emb.reshape(B, L_pad, D)

    # ---- im2col + fused conv: a single MXU call for all filters ------------
    windows = jnp.concatenate(
        [emb[:, s:s + T_pad, :] for s in range(f_max)], axis=2)  # (B, T_pad, K)
    windows = windows.reshape(B * T_pad, K)                      # rows % 8 == 0

    wconv = params_ref[r_wc:r_wc + K, :]                         # (K, CI_PAD)
    bconv = params_ref[r_bc:r_bc + 1, :]                         # (1, CI_PAD)
    scores = jnp.dot(windows, wconv, preferred_element_type=jnp.float32) + bconv
    scores = jnp.maximum(scores, 0.0).reshape(B, T_pad, CI_PAD)

    # ---- mask time steps past each filter's true conv length, then max-pool
    t_idx = jax.lax.broadcasted_iota(jnp.int32, (T_pad, CI_PAD), 0)
    c_idx = jax.lax.broadcasted_iota(jnp.int32, (T_pad, CI_PAD), 1)
    valid_len = jnp.zeros((T_pad, CI_PAD), jnp.int32)
    off = 0
    for f, cn in zip(filters, filter_nums):
        valid_len = jnp.where((c_idx >= off) & (c_idx < off + cn),
                              L - f + 1, valid_len)
        off += cn
    mask = (t_idx < valid_len)[None, :, :]
    pooled = jnp.max(jnp.where(mask, scores, 0.0), axis=1)       # (B, CI_PAD)

    # ---- fully-connected head, lane-dense output ----------------------------
    fcw = params_ref[r_fw:r_fw + CI_PAD, :]                      # (CI_PAD, CI_PAD)
    fcb = params_ref[r_fb:r_fb + 1, :]                           # (1, CI_PAD)
    out_ref[...] = jnp.dot(pooled, fcw,
                           preferred_element_type=jnp.float32) + fcb


def cnn_forward(inp, embed_w, conv_ws, conv_bs, fc_w, fc_b, filters):
    """inp: (B, L) int32 token ids.  Returns (B, CLASS_SIZE) float32 logits."""
    inp = jnp.asarray(inp, jnp.int32)
    B, L = inp.shape
    NE, D = embed_w.shape
    C = fc_w.shape[0]
    filter_nums = [int(w.shape[0]) for w in conv_ws]
    f_max = max(filters)
    f_min = min(filters)
    K = f_max * D
    CI_PAD = 128                         # lane-padded channel / feature / class width

    T_max = L - f_min + 1                # longest conv output length
    T_pad = _round_up(T_max, 8)          # so B*T_pad rows are sublane aligned
    L_pad = _round_up(T_pad + f_max - 1, 8)
    NE_pad = _round_up(NE + 1, 8)        # +1: id == NE maps to a guaranteed-zero row

    # ---- token ids, padded along L with an id that hits a zero table row ----
    ids = jnp.full((B, L_pad), NE, jnp.int32).at[:, :L].set(inp)
    ids = ids.reshape(B * L_pad, 1)

    # ---- pack every parameter into ONE lane-dense (rows, 128) slab ----------
    r_wc = NE_pad
    r_bc = r_wc + K
    r_fw = r_bc + 8
    r_fb = r_fw + CI_PAD
    n_rows = r_fb + 8

    slab = jnp.zeros((n_rows, CI_PAD), jnp.float32)
    slab = slab.at[0:NE, 0:D].set(embed_w.astype(jnp.float32))
    off = 0
    for f, w, b in zip(filters, conv_ws, conv_bs):
        Ci = int(w.shape[0])
        # PyTorch Conv1d weight (Ci, 1, D*f): k -> (tap k//D, dim k%D)
        w2 = w.reshape(Ci, f * D).T.astype(jnp.float32)          # (f*D, Ci)
        slab = slab.at[r_wc:r_wc + f * D, off:off + Ci].set(w2)  # taps beyond f*D stay 0
        slab = slab.at[r_bc, off:off + Ci].set(b.astype(jnp.float32))
        off += Ci
    slab = slab.at[r_fw:r_fw + off, 0:C].set(fc_w.T.astype(jnp.float32))
    slab = slab.at[r_fb, 0:C].set(fc_b.astype(jnp.float32))

    meta = (B, L, D, L_pad, T_pad, NE_pad, f_max,
            tuple(int(f) for f in filters), tuple(filter_nums), CI_PAD)
    kern = functools.partial(_cnn_kernel, meta)

    # Gridless / whole-problem-in-VMEM is right at these sizes (few hundred KB).
    # For large batches, add a grid over B with dimension_semantics=("parallel",).
    out_pad = pl.pallas_call(
        kern,
        out_shape=jax.ShapeDtypeStruct((B, CI_PAD), jnp.float32),
        in_specs=[pl.BlockSpec(memory_space=pltpu.MemorySpace.VMEM),
                  pl.BlockSpec(memory_space=pltpu.MemorySpace.VMEM)],
        out_specs=pl.BlockSpec(memory_space=pltpu.MemorySpace.VMEM),
    )(ids, slab)
    return out_pad[:, :C]


def _reference(inp, embed_w, conv_ws, conv_bs, fc_w, fc_b, filters):
    """Pure-JAX eval-mode forward mirroring the PyTorch module."""
    emb = embed_w[inp].astype(jnp.float32)                       # (B, L, D)
    B, L, D = emb.shape
    feats = []
    for f, w, b in zip(filters, conv_ws, conv_bs):
        Ci = int(w.shape[0])
        T = L - f + 1
        win = jnp.concatenate([emb[:, s:s + T, :] for s in range(f)], axis=2)
        sc = win.reshape(B * T, f * D) @ w.reshape(Ci, f * D).T + b
        feats.append(jnp.max(jax.nn.relu(sc.reshape(B, T, Ci)), axis=1))
    feat = jnp.concatenate(feats, axis=1)
    return feat @ fc_w.T + fc_b


if __name__ == "__main__":
    # Small, forward-consistent hyperparameters (mirrors the params dict).
    BATCH_SIZE = 2
    MAX_SENT_LEN = 8
    WORD_DIM = 32
    VOCAB_SIZE = 50
    CLASS_SIZE = 4
    FILTERS = [2, 3]
    FILTER_NUM = [16, 16]
    NUM_EMBEDDINGS = VOCAB_SIZE + 2

    key = jax.random.PRNGKey(0)
    ks = jax.random.split(key, 4 + 2 * len(FILTERS))

    # Deterministic synthetic parameters (no checkpoint load).
    embed_w = 0.1 * jax.random.normal(ks[0], (NUM_EMBEDDINGS, WORD_DIM),
                                      jnp.float32)
    embed_w = embed_w.at[VOCAB_SIZE + 1].set(0.0)   # padding_idx row = 0

    conv_ws, conv_bs = [], []
    for i, (f, cnum) in enumerate(zip(FILTERS, FILTER_NUM)):
        conv_ws.append(0.1 * jax.random.normal(
            ks[1 + 2 * i], (cnum, 1, WORD_DIM * f), jnp.float32))
        conv_bs.append(0.1 * jax.random.normal(
            ks[2 + 2 * i], (cnum,), jnp.float32))

    fc_w = 0.1 * jax.random.normal(ks[-3], (CLASS_SIZE, sum(FILTER_NUM)),
                                   jnp.float32)
    fc_b = 0.1 * jax.random.normal(ks[-2], (CLASS_SIZE,), jnp.float32)

    inp = jax.random.randint(ks[-1], (BATCH_SIZE, MAX_SENT_LEN), 0, VOCAB_SIZE,
                             dtype=jnp.int32)

    logits = cnn_forward(inp, embed_w, conv_ws, conv_bs, fc_w, fc_b, FILTERS)
    jax.block_until_ready(logits)
    assert logits.shape == (BATCH_SIZE, CLASS_SIZE)

    ref = _reference(inp, embed_w, conv_ws, conv_bs, fc_w, fc_b, FILTERS)
    assert jnp.allclose(logits, ref, atol=1e-2, rtol=1e-2), (logits, ref)

    print("KERNEL_OK")
</pallas_src>

<mosaic_0001>
module attributes {stable_mosaic.version = 11 : i64} {
  func.func @_cnn_kernel(%arg0: memref<32x1xi32, #tpu.memory_space<vmem>>, %arg1: memref<296x128xf32, #tpu.memory_space<vmem>>, %arg2: memref<2x128xf32, #tpu.memory_space<vmem>>) attributes {dimension_semantics = [], scalar_prefetch = 0 : i64, scratch_operands = 0 : i64, tpu.core_type = #tpu.core_type<tc>} {
    %c0 = arith.constant 0 : index
    %c0_0 = arith.constant 0 : index
    %0 = vector.load %arg0[%c0, %c0_0] : memref<32x1xi32, #tpu.memory_space<vmem>>, vector<32x1xi32>
    %1 = tpu.iota {dimensions = array<i32: 1>} : vector<32x56xi32>
    %2 = vector.broadcast %0 : vector<32x1xi32> to vector<32x56xi32>
    %3 = arith.cmpi eq, %2, %1 : vector<32x56xi32>
    %4 = arith.extui %3 : vector<32x56xi1> to vector<32x56xi32>
    %5 = arith.sitofp %4 : vector<32x56xi32> to vector<32x56xf32>
    %c0_1 = arith.constant 0 : index
    %c0_2 = arith.constant 0 : index
    %6 = vector.load %arg1[%c0_1, %c0_2] : memref<296x128xf32, #tpu.memory_space<vmem>>, vector<56x32xf32>
    %cst = arith.constant dense<0.000000e+00> : vector<32x32xf32>
    %7 = tpu.matmul %5, %6, %cst {dimension_numbers = #tpu.dot_dimension_numbers<[1], [0], [0], [1], [0, 0, 1, 1], [], []>} : vector<32x56xf32>, vector<56x32xf32>, vector<32x32xf32> -> vector<32x32xf32>
    %8 = vector.shape_cast %7 : vector<32x32xf32> to vector<2x16x32xf32>
    %9 = vector.extract_strided_slice %8 {offsets = [0, 0, 0], sizes = [2, 8, 32], strides = [1, 1, 1]} : vector<2x16x32xf32> to vector<2x8x32xf32>
    %10 = vector.extract_strided_slice %8 {offsets = [0, 1, 0], sizes = [2, 8, 32], strides = [1, 1, 1]} : vector<2x16x32xf32> to vector<2x8x32xf32>
    %11 = vector.extract_strided_slice %8 {offsets = [0, 2, 0], sizes = [2, 8, 32], strides = [1, 1, 1]} : vector<2x16x32xf32> to vector<2x8x32xf32>
    %12 = tpu.concatenate %9, %10, %11 in 2 : vector<2x8x32xf32>, vector<2x8x32xf32>, vector<2x8x32xf32> -> vector<2x8x96xf32>
    %13 = vector.shape_cast %12 : vector<2x8x96xf32> to vector<16x96xf32>
    %c56 = arith.constant 56 : index
    %c0_3 = arith.constant 0 : index
    %14 = vector.load %arg1[%c56, %c0_3] : memref<296x128xf32, #tpu.memory_space<vmem>>, vector<96x128xf32>
    %c152 = arith.constant 152 : index
    %c0_4 = arith.constant 0 : index
    %15 = vector.load %arg1[%c152, %c0_4] : memref<296x128xf32, #tpu.memory_space<vmem>>, vector<1x128xf32>
    %cst_5 = arith.constant dense<0.000000e+00> : vector<16x128xf32>
    %16 = tpu.matmul %13, %14, %cst_5 {dimension_numbers = #tpu.dot_dimension_numbers<[1], [0], [0], [1], [0, 0, 1, 1], [], []>} : vector<16x96xf32>, vector<96x128xf32>, vector<16x128xf32> -> vector<16x128xf32>
    %17 = vector.broadcast %15 : vector<1x128xf32> to vector<16x128xf32>
    %18 = arith.addf %16, %17 : vector<16x128xf32>
    %cst_6 = arith.constant 0.000000e+00 : f32
    %19 = vector.broadcast %cst_6 : f32 to vector<16x128xf32>
    %20 = arith.maximumf %18, %19 : vector<16x128xf32>
    %21 = vector.shape_cast %20 : vector<16x128xf32> to vector<2x8x128xf32>
    %22 = tpu.iota {dimensions = array<i32: 0>} : vector<8x128xi32>
    %23 = tpu.iota {dimensions = array<i32: 1>} : vector<8x128xi32>
    %c0_i32 = arith.constant 0 : i32
    %24 = vector.broadcast %c0_i32 : i32 to vector<8x128xi32>
    %c0_i32_7 = arith.constant 0 : i32
    %25 = vector.broadcast %c0_i32_7 : i32 to vector<8x128xi32>
    %26 = arith.cmpi sge, %23, %25 : vector<8x128xi32>
    %c16_i32 = arith.constant 16 : i32
    %27 = vector.broadcast %c16_i32 : i32 to vector<8x128xi32>
    %28 = arith.cmpi slt, %23, %27 : vector<8x128xi32>
    %29 = arith.andi %26, %28 : vector<8x128xi1>
    %c7_i32 = arith.constant 7 : i32
    %30 = vector.broadcast %c7_i32 : i32 to vector<8x128xi32>
    %31 = arith.select %29, %30, %24 : vector<8x128xi1>, vector<8x128xi32>
    %c16_i32_8 = arith.constant 16 : i32
    %32 = vector.broadcast %c16_i32_8 : i32 to vector<8x128xi32>
    %33 = arith.cmpi sge, %23, %32 : vector<8x128xi32>
    %c32_i32 = arith.constant 32 : i32
    %34 = vector.broadcast %c32_i32 : i32 to vector<8x128xi32>
    %35 = arith.cmpi slt, %23, %34 : vector<8x128xi32>
    %36 = arith.andi %33, %35 : vector<8x128xi1>
    %c6_i32 = arith.constant 6 : i32
    %37 = vector.broadcast %c6_i32 : i32 to vector<8x128xi32>
    %38 = arith.select %36, %37, %31 : vector<8x128xi1>, vector<8x128xi32>
    %39 = arith.cmpi slt, %22, %38 : vector<8x128xi32>
    %40 = vector.shape_cast %39 : vector<8x128xi1> to vector<1x8x128xi1>
    %cst_9 = arith.constant 0.000000e+00 : f32
    %41 = vector.shape_cast %40 : vector<1x8x128xi1> to vector<1x8x128xi1>
    %42 = vector.broadcast %41 : vector<1x8x128xi1> to vector<2x8x128xi1>
    %43 = vector.broadcast %cst_9 : f32 to vector<2x8x128xf32>
    %44 = arith.select %42, %21, %43 : vector<2x8x128xi1>, vector<2x8x128xf32>
    %cst_10 = arith.constant dense<0xFF800000> : vector<2x128xf32>
    %45 = vector.multi_reduction <maximumf>, %44, %cst_10 [1] : vector<2x8x128xf32> to vector<2x128xf32>
    %c160 = arith.constant 160 : index
    %c0_11 = arith.constant 0 : index
    %46 = vector.load %arg1[%c160, %c0_11] : memref<296x128xf32, #tpu.memory_space<vmem>>, vector<128x128xf32>
    %c288 = arith.constant 288 : index
    %c0_12 = arith.constant 0 : index
    %47 = vector.load %arg1[%c288, %c0_12] : memref<296x128xf32, #tpu.memory_space<vmem>>, vector<1x128xf32>
    %cst_13 = arith.constant dense<0.000000e+00> : vector<2x128xf32>
    %48 = tpu.matmul %45, %46, %cst_13 {dimension_numbers = #tpu.dot_dimension_numbers<[1], [0], [0], [1], [0, 0, 1, 1], [], []>} : vector<2x128xf32>, vector<128x128xf32>, vector<2x128xf32> -> vector<2x128xf32>
    %49 = vector.broadcast %47 : vector<1x128xf32> to vector<2x128xf32>
    %50 = arith.addf %48, %49 : vector<2x128xf32>
    %c0_14 = arith.constant 0 : index
    %c0_15 = arith.constant 0 : index
    %51 = vector.load %arg2[%c0_14, %c0_15] : memref<2x128xf32, #tpu.memory_space<vmem>>, vector<2x128xf32>
    tpu.vector_store %arg2[%c0_14, %c0_15], %50 {strides = array<i32>} : memref<2x128xf32, #tpu.memory_space<vmem>>, vector<2x128xf32>,
    return
  }
}

</mosaic_0001>

<llo_original>
// kernel: tpu_custom_call.1
$region0: #{tpu_custom_call.1}
  #allocation0 [shape = 'u32[]', space=smem, size = 0x4, offset = 0x4, fixed_abs, tag = 'smem constant byte address 0x4 - core index']
  #allocation1 [shape = 'u32[144,128]{1,0:T(1,128)}', space=vmem, size = 0x12000, scoped, tag = 'internal scratch']
  %s0 = inlined_call_operand.vmem [shape: s32[32,1], index: 0, kind: input, shape index: {}]
  %s1 = inlined_call_operand.hbm [shape: f32[296,128], index: 1, kind: input, shape index: {}]
  %s2 = inlined_call_operand.hbm [shape: f32[2,128], index: 2, kind: output, shape index: {}]
  %s3 = sld [smem:[#allocation0]]
  $region22: #{tpu_custom_call.1} parent=0
    _
  %s5 = ssub.s32 1, %s3
  %s6 = scalar_select 0, %s5, %s3
  $region1: #{tpu_custom_call.1} parent=0
    #allocation2 [shape = 'u8[151552]{0}', space=vmem, size = 0x25000, scoped, tag = 'input window, operand 1, single buffered']
    #allocation3 [shape = 's32[1]{0}', space=sflag, size = 0x4, scoped, tag = 'scoped memory for tpu_custom_call.1']
    #allocation4 [shape = 's32[1]{0}', space=sflag, size = 0x4, scoped, tag = 'scoped memory for tpu_custom_call.1']
    #allocation5 [shape = 'u8[1024]{0}', space=vmem, size = 0x400, scoped, tag = 'output window, operand 0, single buffered']
    %7 = vsyncpa [#allocation3], 0
    %8 = vsyncpa [#allocation4], 0
    // Predicated region
    $region2: #{tpu_custom_call.1} parent=1 // pred_check
      _
    $region3: #{tpu_custom_call.1} parent=1 // pred_check_branch
      %10 = sbr.rel (0) target = $region5
    $region4: #{tpu_custom_call.1} parent=1 // pred_region
      _
    $region5: #{tpu_custom_call.1} parent=1 // pred_fallthru
      _
    // Predicated region
    $region6: #{tpu_custom_call.1} parent=1 // pred_check
      _
    $region7: #{tpu_custom_call.1} parent=1 // pred_check_branch
      %12 = sbr.rel (0) target = $region9
    $region8: #{tpu_custom_call.1} parent=1 // pred_region
      %s14 = ssub.s32 4736, 4736
      %15 = vsyncadd [#allocation3], %s14
      %s16 = sshll.u32 [#allocation2], 4
      %s17 = int_to_ptr.vmem [resolvable:$true] %s16
      %22 = dma.hbm_to_vmem [thread:$0]  %s1, 4736, %s17, [#allocation3], 128, 128, 8
    $region9: #{tpu_custom_call.1} parent=1 // pred_fallthru
      _
    // Predicated region
    $region10: #{tpu_custom_call.1} parent=1 // pred_check
      _
    $region11: #{tpu_custom_call.1} parent=1 // pred_check_branch
      %24 = sbr.rel (0) target = $region13
    $region12: #{tpu_custom_call.1} parent=1 // pred_region
      %25 = dma.done [#allocation3], 4736
    $region13: #{tpu_custom_call.1} parent=1 // pred_fallthru
      _
    %v26 = vld [vmem:[%s0] sm:$0xff]
    %v27 = vld [vmem:[%s0 + $0x8] sm:$0xff]
    %v28 = vld [vmem:[%s0 + $0x10] sm:$0xff]
    %v29 = vld [vmem:[%s0 + $0x18] sm:$0xff]
    %v30 = vlaneseq
    %v31 = vand.u32 %v30, 127
    %32 = vset.pattern.permute.xlu0 0
    %33 = vperm.xlu0 %32, %v26
    %v34 = vpop.permute.xlu0 %33
    %35 = vset.pattern.permute.xlu0 0
    %36 = vperm.xlu0 %35, %v27
    %v37 = vpop.permute.xlu0 %36
    %38 = vset.pattern.permute.xlu0 0
    %39 = vperm.xlu0 %38, %v28
    %v40 = vpop.permute.xlu0 %39
    %41 = vset.pattern.permute.xlu0 0
    %42 = vperm.xlu0 %41, %v29
    %v43 = vpop.permute.xlu0 %42
    %vm44 = vcmp.eq.s32.totalorder %v34, %v31
    %vm45 = vcmp.eq.s32.totalorder %v37, %v31
    %vm46 = vcmp.eq.s32.totalorder %v40, %v31
    %vm47 = vcmp.eq.s32.totalorder %v43, %v31
    %v48 = vsel %vm44, 1, 0
    %v49 = vsel %vm45, 1, 0
    %v50 = vsel %vm46, 1, 0
    %v51 = vsel %vm47, 1, 0
    %v52 = vcvt.s32.f32 %v48
    %v53 = vcvt.s32.f32 %v49
    %v54 = vcvt.s32.f32 %v50
    %v55 = vcvt.s32.f32 %v51
    %v56 = vld [vmem:[#allocation2] sm:$0xff]
    %v57 = vld [vmem:[#allocation2 + $0x8] sm:$0xff]
    %v58 = vld [vmem:[#allocation2 + $0x10] sm:$0xff]
    %v59 = vld [vmem:[#allocation2 + $0x18] sm:$0xff]
    %v60 = vld [vmem:[#allocation2 + $0x20] sm:$0xff]
    %v61 = vld [vmem:[#allocation2 + $0x28] sm:$0xff]
    %v62 = vld [vmem:[#allocation2 + $0x30] sm:$0xff]
    %vm63 = vcmask 457728
    %v65 = vsel %vm63, %v52, 0
    %v68 = vsel %vm63, %v53, 0
    %v71 = vsel %vm63, %v54, 0
    %v74 = vsel %vm63, %v55, 0
    %76 = vmatprep.subr.mxu0 0.0
    %77 = vmatpush1.msra.mxu0 0.0
    %78 = vmatprep.subr.mxu0 0.0
    %79 = vmatpush1.msra.mxu0 0.0
    %80 = vmatprep.subr.mxu0 0.0
    %81 = vmatpush1.msra.mxu0 0.0
    %82 = vmatprep.subr.mxu0 0.0
    %83 = vmatpush1.msra.mxu0 0.0
    %84 = vmatprep.subr.mxu0 0.0
    %85 = vmatpush1.msra.mxu0 0.0
    %86 = vmatprep.subr.mxu0 0.0
    %87 = vmatpush1.msra.mxu0 0.0
    %88 = vmatprep.subr.mxu0 0.0
    %89 = vmatpush1.msra.mxu0 0.0
    %90 = vmatprep.subr.mxu0 0.0
    %91 = vmatpush1.msra.mxu0 0.0
    %92 = vmatprep.subr.mxu0 0.0
    %93 = vmatpush1.msra.mxu0 0.0
    %94 = vmatprep.subr.mxu0 0.0
    %95 = vmatpush1.msra.mxu0 %v62
    %96 = vmatprep.subr.mxu0 0.0
    %97 = vmatpush1.msra.mxu0 %v61
    %98 = vmatprep.subr.mxu0 0.0
    %99 = vmatpush1.msra.mxu0 %v60
    %100 = vmatprep.subr.mxu0 0.0
    %101 = vmatpush1.msra.mxu0 %v59
    %102 = vmatprep.subr.mxu0 0.0
    %103 = vmatpush1.msra.mxu0 %v58
    %104 = vmatprep.subr.mxu0 0.0
    %105 = vmatpush1.msra.mxu0 %v57
    %106 = vmatprep.subr.mxu0 0.0
    %107 = vmatpush1.msra.mxu0 %v56
    %108 = vmatprep.subr.mxu0 0.0
    %109 = vmatpush2.msra.mxu0 0.0
    %110 = vmatprep.subr.mxu0 0.0
    %111 = vmatpush2.msra.mxu0 0.0
    %112 = vmatprep.subr.mxu0 0.0
    %113 = vmatpush2.msra.mxu0 0.0
    %114 = vmatprep.subr.mxu0 0.0
    %115 = vmatpush2.msra.mxu0 0.0
    %116 = vmatprep.subr.mxu0 0.0
    %117 = vmatpush2.msra.mxu0 0.0
    %118 = vmatprep.subr.mxu0 0.0
    %119 = vmatpush2.msra.mxu0 0.0
    %120 = vmatprep.subr.mxu0 0.0
    %121 = vmatpush2.msra.mxu0 0.0
    %122 = vmatprep.subr.mxu0 0.0
    %123 = vmatpush2.msra.mxu0 0.0
    %124 = vmatprep.subr.mxu0 0.0
    %125 = vmatpush2.msra.mxu0 0.0
    %126 = vmatprep.subr.mxu0 0.0
    %127 = vmatpush2.msra.mxu0 0.0
    %128 = vmatprep.subr.mxu0 0.0
    %129 = vmatpush2.msra.mxu0 0.0
    %130 = vmatprep.subr.mxu0 0.0
    %131 = vmatpush2.msra.mxu0 0.0
    %132 = vmatprep.subr.mxu0 0.0
    %133 = vmatpush2.msra.mxu0 0.0
    %134 = vmatprep.subr.mxu0 0.0
    %135 = vmatpush2.msra.mxu0 0.0
    %136 = vmatprep.subr.mxu0 0.0
    %137 = vmatpush2.msra.mxu0 0.0
    %138 = vmatprep.subr.mxu0 0.0
    %139 = vmatpush2.msra.mxu0 0.0
    %140 = vmatprep.mubr.f32.mxu0 0.0
    %141 = vmatmul.mubr.f32.gmra.mxu0 %v65
    %v142 = vpop.f32.mrf.mxu0
    %v143 = vadd.f32 0.0, %v142
    %v144 = vpop.f32.mrf.mxu0
    %145 = vmatprep.mubr.f32.mxu0 0.0
    %146 = vmatmul.mubr.f32.gmra.mxu0 %v68
    %v147 = vpop.f32.mrf.mxu0
    %v148 = vadd.f32 0.0, %v147
    %v149 = vpop.f32.mrf.mxu0
    %150 = vmatprep.mubr.f32.mxu0 0.0
    %151 = vmatmul.mubr.f32.gmra.mxu0 %v71
    %v152 = vpop.f32.mrf.mxu0
    %v153 = vadd.f32 0.0, %v152
    %v154 = vpop.f32.mrf.mxu0
    %155 = vmatprep.mubr.f32.mxu0 0.0
    %156 = vmatmul.mubr.f32.gmra.mxu0 %v74
    %v157 = vpop.f32.mrf.mxu0
    %v158 = vadd.f32 0.0, %v157
    %v159 = vpop.f32.mrf.mxu0
    %160 = vdwg.mxu0
    %vm165 = vcmask 1046528
    %v166 = vrot.slane %v143, 1
    %v167 = vrot.slane %v148, 1
    %v168 = vsel %vm165, %v166, %v167
    %v169 = vrot.slane %v153, 1
    %v170 = vrot.slane %v158, 1
    %v171 = vsel %vm165, %v169, %v170
    %172 = vrot.lane.b32.xlu0 %v168, 32
    %v173 = vpop.permute.xlu0 %172
    %174 = vrot.lane.b32.xlu0 %v171, 32
    %v175 = vpop.permute.xlu0 %174
    %vm178 = vcmask 1045504
    %v179 = vrot.slane %v143, 2
    %v180 = vrot.slane %v148, 2
    %v181 = vsel %vm178, %v179, %v180
    %v182 = vrot.slane %v153, 2
    %v183 = vrot.slane %v158, 2
    %v184 = vsel %vm178, %v182, %v183
    %185 = vrot.lane.b32.xlu0 %v181, 64
    %v186 = vpop.permute.xlu0 %185
    %187 = vrot.lane.b32.xlu0 %v184, 64
    %v188 = vpop.permute.xlu0 %187
    %vm191 = vcmask 261120
    %v192 = vsel %vm191, %v143, %v173
    %v193 = vsel %vm191, %v153, %v175
    %vm194 = vcmask 523264
    %v195 = vsel %vm194, %v192, %v186
    %v196 = vsel %vm194, %v193, %v188
    %v197 = vld [vmem:[#allocation2 + $0x38] sm:$0xff]
    %v198 = vld [vmem:[#allocation2 + $0x40] sm:$0xff]
    %v199 = vld [vmem:[#allocation2 + $0x48] sm:$0xff]
    %v200 = vld [vmem:[#allocation2 + $0x50] sm:$0xff]
    %v201 = vld [vmem:[#allocation2 + $0x58] sm:$0xff]
    %v202 = vld [vmem:[#allocation2 + $0x60] sm:$0xff]
    %v203 = vld [vmem:[#allocation2 + $0x68] sm:$0xff]
    %v204 = vld [vmem:[#allocation2 + $0x70] sm:$0xff]
    %v205 = vld [vmem:[#allocation2 + $0x78] sm:$0xff]
    %v206 = vld [vmem:[#allocation2 + $0x80] sm:$0xff]
    %v207 = vld [vmem:[#allocation2 + $0x88] sm:$0xff]
    %v208 = vld [vmem:[#allocation2 + $0x90] sm:$0xff]
    %v209 = vld [vmem:[#allocation2 + $0x98] sm:$0x1]
    %v210 = vlaneseq
    %v211 = vshrl.u32 %v210, 7
    %v212 = vsub.s32 0, %v211
    %v213 = vrot.slane %v209, %v212
    %vm214 = vcmask 785408
    %v216 = vsel %vm214, %v195, 0
    %v219 = vsel %vm214, %v196, 0
    %221 = vmatprep.subr.mxu0 0.0
    %222 = vmatpush1.msra.mxu0 0.0
    %223 = vmatprep.subr.mxu0 0.0
    %224 = vmatpush1.msra.mxu0 0.0
    %225 = vmatprep.subr.mxu0 0.0
    %226 = vmatpush1.msra.mxu0 0.0
    %227 = vmatprep.subr.mxu0 0.0
    %228 = vmatpush1.msra.mxu0 0.0
    %229 = vmatprep.subr.mxu0 0.0
    %230 = vmatpush1.msra.mxu0 %v208
    %231 = vmatprep.subr.mxu0 0.0
    %232 = vmatpush1.msra.mxu0 %v207
    %233 = vmatprep.subr.mxu0 0.0
    %234 = vmatpush1.msra.mxu0 %v206
    %235 = vmatprep.subr.mxu0 0.0
    %236 = vmatpush1.msra.mxu0 %v205
    %237 = vmatprep.subr.mxu0 0.0
    %238 = vmatpush1.msra.mxu0 %v204
    %239 = vmatprep.subr.mxu0 0.0
    %240 = vmatpush1.msra.mxu0 %v203
    %241 = vmatprep.subr.mxu0 0.0
    %242 = vmatpush1.msra.mxu0 %v202
    %243 = vmatprep.subr.mxu0 0.0
    %244 = vmatpush1.msra.mxu0 %v201
    %245 = vmatprep.subr.mxu0 0.0
    %246 = vmatpush1.msra.mxu0 %v200
    %247 = vmatprep.subr.mxu0 0.0
    %248 = vmatpush1.msra.mxu0 %v199
    %249 = vmatprep.subr.mxu0 0.0
    %250 = vmatpush1.msra.mxu0 %v198
    %251 = vmatprep.subr.mxu0 0.0
    %252 = vmatpush1.msra.mxu0 %v197
    %253 = vmatprep.subr.mxu0 0.0
    %254 = vmatpush2.msra.mxu0 0.0
    %255 = vmatprep.subr.mxu0 0.0
    %256 = vmatpush2.msra.mxu0 0.0
    %257 = vmatprep.subr.mxu0 0.0
    %258 = vmatpush2.msra.mxu0 0.0
    %259 = vmatprep.subr.mxu0 0.0
    %260 = vmatpush2.msra.mxu0 0.0
    %261 = vmatprep.subr.mxu0 0.0
    %262 = vmatpush2.msra.mxu0 0.0
    %263 = vmatprep.subr.mxu0 0.0
    %264 = vmatpush2.msra.mxu0 0.0
    %265 = vmatprep.subr.mxu0 0.0
    %266 = vmatpush2.msra.mxu0 0.0
    %267 = vmatprep.subr.mxu0 0.0
    %268 = vmatpush2.msra.mxu0 0.0
    %269 = vmatprep.subr.mxu0 0.0
    %270 = vmatpush2.msra.mxu0 0.0
    %271 = vmatprep.subr.mxu0 0.0
    %272 = vmatpush2.msra.mxu0 0.0
    %273 = vmatprep.subr.mxu0 0.0
    %274 = vmatpush2.msra.mxu0 0.0
    %275 = vmatprep.subr.mxu0 0.0
    %276 = vmatpush2.msra.mxu0 0.0
    %277 = vmatprep.subr.mxu0 0.0
    %278 = vmatpush2.msra.mxu0 0.0
    %279 = vmatprep.subr.mxu0 0.0
    %280 = vmatpush2.msra.mxu0 0.0
    %281 = vmatprep.subr.mxu0 0.0
    %282 = vmatpush2.msra.mxu0 0.0
    %283 = vmatprep.subr.mxu0 0.0
    %284 = vmatpush2.msra.mxu0 0.0
    %285 = vmatprep.mubr.f32.mxu0 0.0
    %286 = vmatmul.mubr.f32.gmra.mxu0 %v216
    %v287 = vpop.f32.mrf.mxu0
    %v288 = vadd.f32 %v213, %v287
    %v289 = vpop.f32.mrf.mxu0
    %290 = vmatprep.mubr.f32.mxu0 0.0
    %291 = vmatmul.mubr.f32.gmra.mxu0 %v219
    %v292 = vpop.f32.mrf.mxu0
    %v293 = vadd.f32 %v213, %v292
    %v294 = vpop.f32.mrf.mxu0
    %295 = vdwg.mxu0
    %v296 = vmax.f32 %v288, 0.0
    %v297 = vmax.f32 %v293, 0.0
    %v298 = vlaneseq
    %v299 = vshrl.u32 %v298, 7
    %vm300 = vcmp.ge.s32.totalorder %v31, 0
    %vm301 = vcmp.lt.s32.totalorder %v31, 16
    %vm302 = vmand %vm300, %vm301
    %v303 = vsel %vm302, 7, 0
    %vm304 = vcmp.ge.s32.totalorder %v31, 16
    %vm305 = vcmp.lt.s32.totalorder %v31, 32
    %vm306 = vmand %vm304, %vm305
    %v307 = vsel %vm306, 6, %v303
    %vm308 = vcmp.lt.s32.totalorder %v299, %v307
    %v309 = vsel %vm308, 1, 0
    %vm310 = vcmp.eq.s32.totalorder %v309, 1
    %v311 = vsel %vm310, %v296, 0.0
    %v312 = vsel %vm310, %v297, 0.0
    %v313 = vrot.slane %v311, 4
    %v314 = vmax.f32 %v311, %v313
    %v315 = vrot.slane %v314, 2
    %v316 = vmax.f32 %v314, %v315
    %v317 = vrot.slane %v316, 1
    %v318 = vmax.f32 %v316, %v317
    %v319 = vrot.slane %v312, 4
    %v320 = vmax.f32 %v312, %v319
    %v321 = vrot.slane %v320, 2
    %v322 = vmax.f32 %v320, %v321
    %v323 = vrot.slane %v322, 1
    %v324 = vmax.f32 %v322, %v323
    %v325 = vld [vmem:[#allocation2 + $0xa0] sm:$0xff]
    %v326 = vld [vmem:[#allocation2 + $0xa8] sm:$0xff]
    %v327 = vld [vmem:[#allocation2 + $0xb0] sm:$0xff]
    %v328 = vld [vmem:[#allocation2 + $0xb8] sm:$0xff]
    %v329 = vld [vmem:[#allocation2 + $0xc0] sm:$0xff]
    %v330 = vld [vmem:[#allocation2 + $0xc8] sm:$0xff]
    %v331 = vld [vmem:[#allocation2 + $0xd0] sm:$0xff]
    %v332 = vld [vmem:[#allocation2 + $0xd8] sm:$0xff]
    %v333 = vld [vmem:[#allocation2 + $0xe0] sm:$0xff]
    %v334 = vld [vmem:[#allocation2 + $0xe8] sm:$0xff]
    %v335 = vld [vmem:[#allocation2 + $0xf0] sm:$0xff]
    %v336 = vld [vmem:[#allocation2 + $0xf8] sm:$0xff]
    %v337 = vld [vmem:[#allocation2 + $0x100] sm:$0xff]
    %v338 = vld [vmem:[#allocation2 + $0x108] sm:$0xff]
    %v339 = vld [vmem:[#allocation2 + $0x110] sm:$0xff]
    %v340 = vld [vmem:[#allocation2 + $0x118] sm:$0xff]
    %v341 = vld [vmem:[#allocation2 + $0x120] sm:$0x1]
    %v342 = vlaneseq
    %v343 = vshrl.u32 %v342, 7
    %v344 = vsub.s32 0, %v343
    %v345 = vrot.slane %v341, %v344
    %vm348 = vcmask 1041409
    %v349 = vsel %vm348, %v324, %v318
    %351 = vmatprep.subr.mxu0 0.0
    %352 = vmatpush1.msra.mxu0 %v340
    %353 = vmatprep.subr.mxu0 0.0
    %354 = vmatpush1.msra.mxu0 %v339
    %355 = vmatprep.subr.mxu0 0.0
    %356 = vmatpush1.msra.mxu0 %v338
    %357 = vmatprep.subr.mxu0 0.0
    %358 = vmatpush1.msra.mxu0 %v337
    %359 = vmatprep.subr.mxu0 0.0
    %360 = vmatpush1.msra.mxu0 %v336
    %361 = vmatprep.subr.mxu0 0.0
    %362 = vmatpush1.msra.mxu0 %v335
    %363 = vmatprep.subr.mxu0 0.0
    %364 = vmatpush1.msra.mxu0 %v334
    %365 = vmatprep.subr.mxu0 0.0
    %366 = vmatpush1.msra.mxu0 %v333
    %367 = vmatprep.subr.mxu0 0.0
    %368 = vmatpush1.msra.mxu0 %v332
    %369 = vmatprep.subr.mxu0 0.0
    %370 = vmatpush1.msra.mxu0 %v331
    %371 = vmatprep.subr.mxu0 0.0
    %372 = vmatpush1.msra.mxu0 %v330
    %373 = vmatprep.subr.mxu0 0.0
    %374 = vmatpush1.msra.mxu0 %v329
    %375 = vmatprep.subr.mxu0 0.0
    %376 = vmatpush1.msra.mxu0 %v328
    %377 = vmatprep.subr.mxu0 0.0
    %378 = vmatpush1.msra.mxu0 %v327
    %379 = vmatprep.subr.mxu0 0.0
    %380 = vmatpush1.msra.mxu0 %v326
    %381 = vmatprep.subr.mxu0 0.0
    %382 = vmatpush1.msra.mxu0 %v325
    %383 = vmatprep.subr.mxu0 0.0
    %384 = vmatpush2.msra.mxu0 0.0
    %385 = vmatprep.subr.mxu0 0.0
    %386 = vmatpush2.msra.mxu0 0.0
    %387 = vmatprep.subr.mxu0 0.0
    %388 = vmatpush2.msra.mxu0 0.0
    %389 = vmatprep.subr.mxu0 0.0
    %390 = vmatpush2.msra.mxu0 0.0
    %391 = vmatprep.subr.mxu0 0.0
    %392 = vmatpush2.msra.mxu0 0.0
    %393 = vmatprep.subr.mxu0 0.0
    %394 = vmatpush2.msra.mxu0 0.0
    %395 = vmatprep.subr.mxu0 0.0
    %396 = vmatpush2.msra.mxu0 0.0
    %397 = vmatprep.subr.mxu0 0.0
    %398 = vmatpush2.msra.mxu0 0.0
    %399 = vmatprep.subr.mxu0 0.0
    %400 = vmatpush2.msra.mxu0 0.0
    %401 = vmatprep.subr.mxu0 0.0
    %402 = vmatpush2.msra.mxu0 0.0
    %403 = vmatprep.subr.mxu0 0.0
    %404 = vmatpush2.msra.mxu0 0.0
    %405 = vmatprep.subr.mxu0 0.0
    %406 = vmatpush2.msra.mxu0 0.0
    %407 = vmatprep.subr.mxu0 0.0
    %408 = vmatpush2.msra.mxu0 0.0
    %409 = vmatprep.subr.mxu0 0.0
    %410 = vmatpush2.msra.mxu0 0.0
    %411 = vmatprep.subr.mxu0 0.0
    %412 = vmatpush2.msra.mxu0 0.0
    %413 = vmatprep.subr.mxu0 0.0
    %414 = vmatpush2.msra.mxu0 0.0
    %415 = vmatprep.mubr.f32.mxu0 0.0
    %416 = vmatmul.mubr.f32.gmra.mxu0 %v349
    %v417 = vpop.f32.mrf.mxu0
    %v418 = vadd.f32 %v345, %v417
    %v419 = vpop.f32.mrf.mxu0
    %420 = vdwg.mxu0
    %421 = vst [vmem:[#allocation5] sm:$0x3] %v418
    // Predicated region
    $region14: #{tpu_custom_call.1} parent=1 // pred_check
      _
    $region15: #{tpu_custom_call.1} parent=1 // pred_check_branch
      %423 = sbr.rel (0) target = $region17
    $region16: #{tpu_custom_call.1} parent=1 // pred_region
      %s425 = ssub.s32 32, 32
      %426 = vsyncadd [#allocation4], %s425
      %s428 = sshll.u32 [#allocation5], 4
      %s429 = int_to_ptr.vmem [resolvable:$true] %s428
      %431 = dma.vmem_to_hbm [thread:$0]  %s429, 32, %s2, [#allocation4]
    $region17: #{tpu_custom_call.1} parent=1 // pred_fallthru
      _
    // Predicated region
    $region18: #{tpu_custom_call.1} parent=1 // pred_check
      _
    $region19: #{tpu_custom_call.1} parent=1 // pred_check_branch
      %433 = sbr.rel (0) target = $region21
    $region20: #{tpu_custom_call.1} parent=1 // pred_region
      %434 = dma.done [#allocation4], 32
    $region21: #{tpu_custom_call.1} parent=1 // pred_fallthru
      _
    %435 = vsyncpa [#allocation3], 1
    %436 = vsyncpa [#allocation4], 1

</llo_original>
